<compile_context>
chip_gen: v5e
topology: v5e:2x2
jax: 0.10.0
libtpu: 0.0.40
codegen_flags: <defaults>
</compile_context>

<pallas_src>
import math

import jax
import jax.numpy as jnp
from jax.experimental import pallas as pl
from jax.experimental.pallas import tpu as pltpu


def build_pe_table(d_model: int, max_len: int = 5000) -> jax.Array:
    """Sinusoidal table identical to the PyTorch __init__ (kept in fp32)."""
    position = jnp.arange(0, max_len, dtype=jnp.float32)[:, None]         # (max_len, 1)
    div_term = jnp.exp(
        jnp.arange(0, d_model, 2, dtype=jnp.float32)
        * (-math.log(10000.0) / d_model)
    )                                                                      # (ceil(D/2),)
    angles = position * div_term                                           # (max_len, ceil(D/2))
    pe = jnp.zeros((max_len, d_model), dtype=jnp.float32)
    pe = pe.at[:, 0::2].set(jnp.sin(angles))
    n_cos = d_model // 2                                                   # explicit floor(D/2)
    pe = pe.at[:, 1::2].set(jnp.cos(angles)[:, :n_cos])
    return pe                                                              # (max_len, D), fp32


def _pe_add_kernel(x_ref, pe_ref, o_ref):
    # x_ref / o_ref: (Bt, ts, Dp) block of x; pe_ref: (ts, Dp) fp32 PE slice.
    # Add in fp32 (fp32 registered buffer in the torch module), cast to x dtype.
    # TODO(synk): torch type-promotion would return fp32 for bf16/fp16 x; we keep x.dtype.
    o_ref[...] = (
        x_ref[...].astype(jnp.float32) + pe_ref[...][None, :, :]
    ).astype(o_ref.dtype)


def _vmem_capacity_bytes() -> int:
    try:
        cap = getattr(pltpu.get_tpu_info(), "vmem_capacity_bytes", None)
        if cap:
            return int(cap)
    except Exception:
        pass
    return 64 * 1024 * 1024          # conservative default (v7x per-TC VMEM)


_SMALL_INPUT_BYTES = 256 * 1024      # below this, a bare add is cheaper than dispatch


def positional_encoding_forward(
    x: jax.Array, pe_full: jax.Array, *, force_pallas: bool = False
) -> jax.Array:
    """x: (B, S, D); pe_full: (max_len, D) fp32. Returns x + pe[:S] broadcast over batch."""
    B, S, D = x.shape
    max_len = pe_full.shape[0]
    assert S <= max_len, f"sequence length {S} exceeds max_len {max_len}"

    isz = jnp.dtype(x.dtype).itemsize

    # ---- small-input fallback: kernel dispatch would dominate; XLA fuses this.
    if not force_pallas and B * S * D * isz <= _SMALL_INPUT_BYTES:
        return (x.astype(jnp.float32) + pe_full[:S][None, :, :]).astype(x.dtype)

    # ---- generalized lane-dense packing: last dim -> 128 whenever S*D % 128 == 0.
    if D % 128 == 0:
        Sp, Dp = S, D
    elif (S * D) % 128 == 0:
        Sp, Dp = (S * D) // 128, 128
    else:
        Sp, Dp = S, D                 # masked-store fallback (still correct)
    xr = x.reshape(B, Sp, Dp)

    # ---- tile selection: fold batch into the block, chip-aware byte budget.
    sub = max(8, 32 // isz)           # sublane granularity: fp32->8, bf16->16, int8->32
    vmem_cap = _vmem_capacity_bytes()
    per_step_budget = max(2 * 1024 * 1024, min(vmem_cap // 8, 8 * 1024 * 1024))

    def step_bytes(bt, ts_):          # x block + out block + fp32 PE block
        return ts_ * (bt * Dp * isz * 2 + Dp * 4)

    min_ts = Sp if Sp <= sub else sub
    if step_bytes(B, min_ts) <= per_step_budget:
        Bt = B                        # whole batch in one block: PE fetched once per seq tile
    else:
        Bt = max(1, min(B, per_step_budget // step_bytes(1, min_ts)))

    if Sp <= sub:
        ts = Sp                       # full dim is always a legal block size
    else:
        ts_cap = (per_step_budget // (Bt * Dp * isz * 2 + Dp * 4)) // sub * sub
        ts = Sp if ts_cap >= Sp else max(sub, int(ts_cap))

    num_s = pl.cdiv(Sp, ts)
    num_b = pl.cdiv(B, Bt)

    # ---- PE operand: avoid materializing a per-call HBM slice when possible.
    if Dp == D:
        pe2d = pe_full                                            # (max_len, D), no copy
    elif (max_len * D) % Dp == 0:
        pe2d = pe_full.reshape((max_len * D) // Dp, Dp)           # free contiguous reshape
    else:
        pe2d = pe_full[:S].reshape(Sp, Dp)
    if ts % 8 != 0 and pe2d.shape[0] != Sp:
        # Block first dim must be 8-aligned or equal to the array's full dim.
        pe2d = pe2d[:Sp]

    blk = step_bytes(Bt, ts)
    vmem_limit = int(
        min(vmem_cap * 3 // 4, max(16 * 1024 * 1024, 2 * blk + 4 * 1024 * 1024))
    )

    out = pl.pallas_call(
        _pe_add_kernel,
        out_shape=jax.ShapeDtypeStruct((B, Sp, Dp), x.dtype),
        grid_spec=pltpu.PrefetchScalarGridSpec(
            num_scalar_prefetch=0,
            # Batch innermost: the PE block index is unchanged across consecutive
            # steps, so Pallas elides its re-DMA entirely.
            grid=(num_s, num_b),
            in_specs=[
                pl.BlockSpec((Bt, ts, Dp), lambda s, b: (b, s, 0)),   # x tile
                pl.BlockSpec((ts, Dp), lambda s, b: (s, 0)),          # PE tile (per seq tile)
            ],
            out_specs=pl.BlockSpec((Bt, ts, Dp), lambda s, b: (b, s, 0)),
        ),
        compiler_params=pltpu.CompilerParams(
            dimension_semantics=("parallel", "parallel"),
            vmem_limit_bytes=vmem_limit,
        ),
    )(xr, pe2d)

    return out.reshape(B, S, D)


if __name__ == "__main__":
    MAX_LEN = 5000

    def check(B, S, D, dtype, force):
        key = jax.random.PRNGKey(0)
        x = jax.random.normal(key, (B, S, D), dtype=jnp.float32).astype(dtype)
        pe_full = build_pe_table(D, max_len=MAX_LEN)
        out = jax.block_until_ready(
            positional_encoding_forward(x, pe_full, force_pallas=force)
        )
        ref = (x.astype(jnp.float32) + pe_full[:S][None, :, :]).astype(dtype)
        assert out.shape == (B, S, D), f"bad shape for {(B, S, D, dtype)}"
        assert out.dtype == dtype, f"bad dtype for {(B, S, D, dtype)}"
        atol = 1e-5 if dtype == jnp.float32 else 2e-2
        assert jnp.allclose(
            out.astype(jnp.float32), ref.astype(jnp.float32), atol=atol, rtol=1e-5
        ), f"mismatch vs reference for {(B, S, D, dtype)}"

    # Primary small example consistent with the module (batch=2, seq=8, d_model=32),
    # forced through the Pallas path so the kernel is actually exercised.
    check(2, 8, 32, jnp.float32, True)
    # Larger shape taking the natural kernel path; D=96 exercises S*D%128 packing.
    check(4, 256, 96, jnp.float32, False)
    # Non-packable shape (masked-store fallback path).
    check(2, 7, 48, jnp.float32, True)
    # bf16 activations (16-row sublane alignment path).
    check(2, 64, 80, jnp.bfloat16, True)

    print("KERNEL_OK")
</pallas_src>

<mosaic_0001>
module attributes {stable_mosaic.version = 11 : i64} {
  func.func @_pe_add_kernel(%arg0: i32, %arg1: i32, %arg2: memref<2x2x128xf32, #tpu.memory_space<vmem>>, %arg3: memref<2x128xf32, #tpu.memory_space<vmem>>, %arg4: memref<2x2x128xf32, #tpu.memory_space<vmem>>) attributes {dimension_semantics = [#tpu.dimension_semantics<parallel>, #tpu.dimension_semantics<parallel>], iteration_bounds = array<i64: 1, 1>, scalar_prefetch = 0 : i64, scratch_operands = 0 : i64, tpu.core_type = #tpu.core_type<tc>, window_params = [{transform_indices = @transform_0, window_bounds = array<i64: 2, 2, 128>}, {transform_indices = @transform_1, window_bounds = array<i64: 2, 128>}, {transform_indices = @transform_2, window_bounds = array<i64: 2, 2, 128>}]} {
    %c0 = arith.constant 0 : index
    %c0_0 = arith.constant 0 : index
    %c0_1 = arith.constant 0 : index
    %0 = vector.load %arg2[%c0, %c0_0, %c0_1] : memref<2x2x128xf32, #tpu.memory_space<vmem>>, vector<2x2x128xf32>
    %c0_2 = arith.constant 0 : index
    %c0_3 = arith.constant 0 : index
    %1 = vector.load %arg3[%c0_2, %c0_3] : memref<2x128xf32, #tpu.memory_space<vmem>>, vector<2x128xf32>
    %2 = vector.shape_cast %1 : vector<2x128xf32> to vector<1x2x128xf32>
    %3 = vector.broadcast %2 : vector<1x2x128xf32> to vector<2x2x128xf32>
    %4 = arith.addf %0, %3 : vector<2x2x128xf32>
    %c0_4 = arith.constant 0 : index
    %c0_5 = arith.constant 0 : index
    %c0_6 = arith.constant 0 : index
    %5 = vector.load %arg4[%c0_4, %c0_5, %c0_6] : memref<2x2x128xf32, #tpu.memory_space<vmem>>, vector<2x2x128xf32>
    tpu.vector_store %arg4[%c0_4, %c0_5, %c0_6], %4 {strides = array<i32>} : memref<2x2x128xf32, #tpu.memory_space<vmem>>, vector<2x2x128xf32>,
    return
  }
  func.func @transform_0(%arg0: i32, %arg1: i32) -> (i32, i32, i32) {
    %c0_i32 = arith.constant 0 : i32
    %c0_i32_0 = arith.constant 0 : i32
    return %arg1, %arg0, %c0_i32 : i32, i32, i32
  }
  func.func @transform_1(%arg0: i32, %arg1: i32) -> (i32, i32) {
    %c0_i32 = arith.constant 0 : i32
    %c0_i32_0 = arith.constant 0 : i32
    return %arg0, %c0_i32 : i32, i32
  }
  func.func @transform_2(%arg0: i32, %arg1: i32) -> (i32, i32, i32) {
    %c0_i32 = arith.constant 0 : i32
    %c0_i32_0 = arith.constant 0 : i32
    return %arg1, %arg0, %c0_i32 : i32, i32, i32
  }
}

</mosaic_0001>

<llo_original>
// kernel: tpu_custom_call.1
$region0: #{tpu_custom_call.1}
  #allocation0 [shape = 'u32[]', space=smem, size = 0x4, offset = 0x4, fixed_abs, tag = 'smem constant byte address 0x4 - core index']
  #allocation1 [shape = 'u32[72,128]{1,0:T(1,128)}', space=vmem, size = 0x9000, scoped, tag = 'internal scratch']
  %s0 = inlined_call_operand.hbm [shape: f32[2,2,128], index: 0, kind: input, shape index: {}]
  %s1 = inlined_call_operand.hbm [shape: f32[2,128], index: 1, kind: input, shape index: {}]
  %s2 = inlined_call_operand.hbm [shape: f32[2,2,128], index: 2, kind: output, shape index: {}]
  %s3 = sld [smem:[#allocation0]]
  $region26: #{tpu_custom_call.1} parent=0
    _
  %s5 = ssub.s32 1, %s3
  %s6 = scalar_select 0, %s5, %s3
  $region1: #{tpu_custom_call.1} parent=0
    #allocation2 [shape = 'u8[2048]{0}', space=vmem, size = 0x800, scoped, tag = 'input window, operand 0, single buffered']
    #allocation3 [shape = 's32[1]{0}', space=sflag, size = 0x4, scoped, tag = 'scoped memory for tpu_custom_call.1']
    #allocation4 [shape = 's32[1]{0}', space=sflag, size = 0x4, scoped, tag = 'scoped memory for tpu_custom_call.1']
    #allocation5 [shape = 'u8[1024]{0}', space=vmem, size = 0x400, scoped, tag = 'input window, operand 1, single buffered']
    #allocation6 [shape = 's32[1]{0}', space=sflag, size = 0x4, scoped, tag = 'scoped memory for tpu_custom_call.1']
    #allocation7 [shape = 'u8[2048]{0}', space=vmem, size = 0x800, scoped, tag = 'output window, operand 0, single buffered']
    %7 = vsyncpa [#allocation3], 0
    %8 = vsyncpa [#allocation6], 0
    %9 = vsyncpa [#allocation4], 0
    // Predicated region
    $region2: #{tpu_custom_call.1} parent=1 // pred_check
      _
    $region3: #{tpu_custom_call.1} parent=1 // pred_check_branch
      %11 = sbr.rel (0) target = $region5
    $region4: #{tpu_custom_call.1} parent=1 // pred_region
      %13 = vsyncadd [#allocation3], 0
      %s14 = sshll.u32 %s0, 4
      %s15 = int_to_ptr.hbm [resolvable:$true] %s14
      %s16 = sshll.u32 [#allocation2], 4
      %s17 = int_to_ptr.vmem [resolvable:$true] %s16
      %22 = dma.hbm_to_vmem [thread:$0]  %s15, 64, %s17, [#allocation3], 32, 32, 2
    $region5: #{tpu_custom_call.1} parent=1 // pred_fallthru
      _
    // Predicated region
    $region6: #{tpu_custom_call.1} parent=1 // pred_check
      _
    $region7: #{tpu_custom_call.1} parent=1 // pred_check_branch
      %24 = sbr.rel (0) target = $region9
    $region8: #{tpu_custom_call.1} parent=1 // pred_region
      %26 = vsyncadd [#allocation6], 0
      %s28 = sshll.u32 %s1, 4
      %s29 = int_to_ptr.hbm [resolvable:$true] %s28
      %s30 = sshll.u32 [#allocation5], 4
      %s31 = int_to_ptr.vmem [resolvable:$true] %s30
      %33 = dma.hbm_to_vmem [thread:$0]  %s29, 32, %s31, [#allocation6]
    $region9: #{tpu_custom_call.1} parent=1 // pred_fallthru
      _
    // Predicated region
    $region10: #{tpu_custom_call.1} parent=1 // pred_check
      _
    $region11: #{tpu_custom_call.1} parent=1 // pred_check_branch
      %35 = sbr.rel (0) target = $region13
    $region12: #{tpu_custom_call.1} parent=1 // pred_region
      %37 = dma.done [#allocation3], 64
    $region13: #{tpu_custom_call.1} parent=1 // pred_fallthru
      _
    // Predicated region
    $region14: #{tpu_custom_call.1} parent=1 // pred_check
      _
    $region15: #{tpu_custom_call.1} parent=1 // pred_check_branch
      %39 = sbr.rel (0) target = $region17
    $region16: #{tpu_custom_call.1} parent=1 // pred_region
      %41 = dma.done [#allocation6], 32
    $region17: #{tpu_custom_call.1} parent=1 // pred_fallthru
      _
    %v42 = vld [vmem:[#allocation2] sm:$0x3]
    %v43 = vld [vmem:[#allocation2 + $0x2] sm:$0x3]
    %v44 = vld [vmem:[#allocation5] sm:$0x3]
    %v45 = vadd.f32 %v42, %v44
    %v46 = vadd.f32 %v43, %v44
    %47 = vst [vmem:[#allocation7] sm:$0x3] %v45
    %48 = vst [vmem:[#allocation7 + $0x2] sm:$0x3] %v46
    // Predicated region
    $region18: #{tpu_custom_call.1} parent=1 // pred_check
      _
    $region19: #{tpu_custom_call.1} parent=1 // pred_check_branch
      %50 = sbr.rel (0) target = $region21
    $region20: #{tpu_custom_call.1} parent=1 // pred_region
      %52 = vsyncadd [#allocation4], 0
      %s53 = sshll.u32 [#allocation7], 4
      %s54 = int_to_ptr.vmem [resolvable:$true] %s53
      %s55 = sshll.u32 %s2, 4
      %s56 = int_to_ptr.hbm [resolvable:$true] %s55
      %61 = dma.vmem_to_hbm [thread:$0]  %s54, 64, %s56, [#allocation4], 32, 32, 2
    $region21: #{tpu_custom_call.1} parent=1 // pred_fallthru
      _
    // Predicated region
    $region22: #{tpu_custom_call.1} parent=1 // pred_check
      _
    $region23: #{tpu_custom_call.1} parent=1 // pred_check_branch
      %63 = sbr.rel (0) target = $region25
    $region24: #{tpu_custom_call.1} parent=1 // pred_region
      %65 = dma.done [#allocation4], 64
    $region25: #{tpu_custom_call.1} parent=1 // pred_fallthru
      _
    %66 = vsyncpa [#allocation3], 1
    %67 = vsyncpa [#allocation6], 1
    %68 = vsyncpa [#allocation4], 1

</llo_original>
